<compile_context>
chip_gen: v6e
topology: v6e:2x2x1
jax: 0.10.0
libtpu: 0.0.40
codegen_flags: <defaults>
</compile_context>

<pallas_src>
import functools

import jax
import jax.numpy as jnp
from jax.experimental import pallas as pl
from jax.experimental.pallas import tpu as pltpu


# ---------------------------------------------------------------------------
# Kernel (fused: hidden Linear+ReLU  ->  deconv taps  ->  sigmoid)
# ---------------------------------------------------------------------------
def fused_decoder_kernel(wt_ref, bd_ref, x_ref, w1_ref, b1_ref, o_ref, *, C):
    """One grid step handles one lane tile T of the (cropped, padded) spatial axis.

    wt_ref : (4*C,) f32 SMEM -- ConvTranspose taps, wt[k*C + c] = Wd[c,0,k//2,k%2]
    bd_ref : (1,)   f32 SMEM -- ConvTranspose bias
    x_ref  : (B, lod) bf16   -- latent
    w1_ref : (1, C, lod, T) bf16 -- hidden weights, pre-tiled (contiguous per step)
    b1_ref : (C, 1, T) f32   -- hidden bias
    o_ref  : (B, 4, T) f32   -- the 4 deconv taps (lane-dense spatial axis)
    """
    x = x_ref[...]                       # (B, lod) bf16
    bias = bd_ref[0]                     # scalar (SMEM)

    # Loop interchange: keep only the 4 tap accumulators live; fold each
    # channel's hidden row into them right after its dot (VPU FMAs), then drop it.
    accs = None
    for c in range(C):
        hc = jnp.dot(x, w1_ref[0, c], preferred_element_type=jnp.float32)   # (B, T) MXU
        hc = jnp.maximum(hc + b1_ref[c], 0.0)                               # ReLU (VPU)
        if accs is None:
            accs = [wt_ref[k * C + c] * hc for k in range(4)]
        else:
            accs = [accs[k] + wt_ref[k * C + c] * hc for k in range(4)]

    for k in range(4):
        o_ref[:, k, :] = jax.nn.sigmoid(accs[k] + bias)


# ---------------------------------------------------------------------------
# Tiling policy (VMEM-budget aware)
# ---------------------------------------------------------------------------
_VMEM_PIPE_BUDGET = 24 * 1024 * 1024   # double-buffered working set; safe on v7x (64 MiB phys)


def _round_up(x, m):
    return ((x + m - 1) // m) * m


def _pipeline_bytes(T, C, lod, B):
    """Approximate double-buffered VMEM bytes for one pipelined grid step."""
    w1 = C * lod * T * 2                       # bf16 W1 tile
    b1 = C * 8 * T * 4                         # f32 b1 tile (sublane-padded 1->8)
    out = B * 8 * T * 4                        # f32 (B,4,T) block ((4,T) pads to (8,T))
    x = 8 * _round_up(lod, 128) * 2            # bf16 latent block (padded)
    return 2 * (w1 + b1 + out) + 2 * x


def _pick_tile(hwp, C, lod, B):
    """Largest multiple-of-128 divisor of hwp fitting the VMEM pipeline budget."""
    best = 128
    for T in range(128, hwp + 1, 128):
        if hwp % T == 0 and _pipeline_bytes(T, C, lod, B) <= _VMEM_PIPE_BUDGET:
            best = T
    # Large problems only: keep >=4 grid steps (2 TCs on v7x x double-buffering),
    # but never shrink below 512 lanes (tile-128 sits far below the HBM roofline).
    total_w1_bytes = C * lod * hwp * 2
    if total_w1_bytes >= (8 << 20):
        while hwp // best < 4 and best >= 1024:
            best //= 2
    return best


# ---------------------------------------------------------------------------
# Wrapper
# ---------------------------------------------------------------------------
def bernoulli_decoder_forward(latent_mean, params, *, C, H, W):
    """Forward pass matching the PyTorch BernoulliDecoder semantics.

    latent_mean: (B, lod) float32
    returns:     (B, 1, 2H-10, 2W-10) float32   (NCHW, out_channels=1)
    """
    W1, b1, Wd, bd = params["W1"], params["b1"], params["Wd"], params["bd"]
    B, lod = latent_mean.shape
    assert H >= 6 and W >= 6, "ConvTranspose2d(k=2,s=2,padding=5) needs H,W >= 6"

    # --- crop-before-compute -------------------------------------------------
    # Only hidden positions i in [2, H-3], j in [2, W-3] (union over the 4 taps)
    # survive the padding=5 crop; slice W1/b1 columns to that (H-4)x(W-4) window
    # and zero-pad the spatial axis to a lane-aligned multiple of 128.
    Hc, Wc = H - 4, W - 4
    HWc = Hc * Wc
    HWp = _round_up(HWc, 128)
    pad = HWp - HWc

    w1_c = W1.reshape(lod, C, H, W)[:, :, 2:H - 2, 2:W - 2].reshape(lod, C, HWc)
    b1_c = b1.reshape(C, H, W)[:, 2:H - 2, 2:W - 2].reshape(C, HWc)
    if pad:
        w1_c = jnp.pad(w1_c, ((0, 0), (0, 0), (0, pad)))
        b1_c = jnp.pad(b1_c, ((0, 0), (0, pad)))

    T = _pick_tile(HWp, C, lod, B)
    n_tiles = HWp // T

    # Pre-tile W1 so each grid step is one fully contiguous DMA; stream as bf16.
    w1_t = (w1_c.transpose(1, 0, 2)                 # (C, lod, HWp)
                 .reshape(C, lod, n_tiles, T)
                 .transpose(2, 0, 1, 3)             # (n_tiles, C, lod, T)
                 .astype(jnp.bfloat16))
    b1_t = b1_c.reshape(C, 1, HWp).astype(jnp.float32)

    # ConvTranspose taps flattened 1-D for SMEM: wt[k*C + c] = Wd[c,0,k//2,k%2].
    wt = Wd.reshape(C, 4).T.reshape(-1).astype(jnp.float32)    # (4*C,)
    bd = bd.astype(jnp.float32)                                # (1,)
    x_bf16 = latent_mean.astype(jnp.bfloat16)

    vmem_limit = int(min(48 << 20,
                         max(32 << 20, _pipeline_bytes(T, C, lod, B) + (8 << 20))))

    out = pl.pallas_call(
        functools.partial(fused_decoder_kernel, C=C),
        out_shape=jax.ShapeDtypeStruct((B, 4, HWp), jnp.float32),
        grid=(n_tiles,),
        in_specs=[
            pl.BlockSpec(memory_space=pltpu.MemorySpace.SMEM),       # wt (4*C,)
            pl.BlockSpec(memory_space=pltpu.MemorySpace.SMEM),       # bd (1,)
            pl.BlockSpec((B, lod), lambda t: (0, 0)),                # latent (B, lod)
            pl.BlockSpec((1, C, lod, T), lambda t: (t, 0, 0, 0)),    # W1 tile (contiguous)
            pl.BlockSpec((C, 1, T), lambda t: (0, 0, t)),            # b1 tile
        ],
        out_specs=pl.BlockSpec((B, 4, T), lambda t: (0, 0, t)),      # lane-dense taps
        compiler_params=pltpu.CompilerParams(
            dimension_semantics=("parallel",),
            vmem_limit_bytes=vmem_limit),
    )(wt, bd, x_bf16, w1_t, b1_t)

    # Interleave the 4 parity taps of the cropped window into a (2Hc, 2Wc) plane,
    # then drop the 1-pixel ring the padding=5 crop removes from it.
    taps = out[:, :, :HWc].reshape(B, 2, 2, Hc, Wc)              # (B, ki, kj, i', j')
    plane = taps.transpose(0, 3, 1, 4, 2).reshape(B, 2 * Hc, 2 * Wc)
    mean = plane[:, 1:-1, 1:-1]                                  # (B, 2H-10, 2W-10)
    return mean.reshape(B, 1, 2 * H - 10, 2 * W - 10)


# ---------------------------------------------------------------------------
# Deterministic parameter construction
# ---------------------------------------------------------------------------
def make_params(key, lod, C, H, W):
    k1, k2, k3, k4 = jax.random.split(key, 4)
    CHW = C * H * W
    return {
        # hidden Linear(lod -> C*H*W)
        "W1": 0.1 * jax.random.normal(k1, (lod, CHW), jnp.float32),
        "b1": 0.1 * jax.random.normal(k2, (CHW,), jnp.float32),
        # ConvTranspose2d weight: (in_channels=C, out_channels=1, 2, 2), bias: (1,)
        "Wd": 0.5 * jax.random.normal(k3, (C, 1, 2, 2), jnp.float32),
        "bd": 0.1 * jax.random.normal(k4, (1,), jnp.float32),
    }


# ---------------------------------------------------------------------------
# Main
# ---------------------------------------------------------------------------
if __name__ == "__main__":
    B, LOD, C, H, W = 2, 32, 4, 16, 16   # out spatial = 2*16 - 10 = 22

    key = jax.random.PRNGKey(0)
    kx, kp = jax.random.split(key)
    latent_mean = jax.random.normal(kx, (B, LOD), jnp.float32)
    params = make_params(kp, LOD, C, H, W)

    out = bernoulli_decoder_forward(latent_mean, params, C=C, H=H, W=W)
    out = jax.block_until_ready(out)
    assert out.shape == (B, 1, 2 * H - 10, 2 * W - 10), out.shape

    # --- independent pure-JAX reference (scatter-style ConvTranspose2d) ---
    # The kernel streams W1/x as bf16; compare against the same bf16-rounded
    # values (upcast to f32) so the check isolates kernel math, not quantization.
    W1_ref = params["W1"].astype(jnp.bfloat16).astype(jnp.float32)
    x_ref = latent_mean.astype(jnp.bfloat16).astype(jnp.float32)
    feat_ref = jnp.maximum(x_ref @ W1_ref + params["b1"], 0.0).reshape(B, C, H, W)
    full_ref = jnp.zeros((B, 2 * H, 2 * W), jnp.float32)
    for ki in range(2):
        for kj in range(2):
            contrib = jnp.einsum("bchw,c->bhw", feat_ref, params["Wd"][:, 0, ki, kj])
            full_ref = full_ref.at[:, ki::2, kj::2].add(contrib)
    full_ref = full_ref + params["bd"][0]
    ref = jax.nn.sigmoid(full_ref[:, 5:2 * H - 5, 5:2 * W - 5])[:, None, :, :]

    err = float(jnp.max(jnp.abs(out - ref)))
    assert jnp.allclose(out, ref, atol=1e-4, rtol=1e-4), err
    print("KERNEL_OK")
</pallas_src>

<mosaic_0001>
module attributes {stable_mosaic.version = 11 : i64} {
  func.func @fused_decoder_kernel(%arg0: i32, %arg1: memref<16xf32, #tpu.memory_space<smem>>, %arg2: memref<1xf32, #tpu.memory_space<smem>>, %arg3: memref<2x32xbf16, #tpu.memory_space<vmem>>, %arg4: memref<1x4x32x256xbf16, #tpu.memory_space<vmem>>, %arg5: memref<4x1x256xf32, #tpu.memory_space<vmem>>, %arg6: memref<2x4x256xf32, #tpu.memory_space<vmem>>) attributes {dimension_semantics = [#tpu.dimension_semantics<parallel>], iteration_bounds = array<i64: 1>, scalar_prefetch = 0 : i64, scratch_operands = 0 : i64, tpu.core_type = #tpu.core_type<tc>, window_params = [{transform_indices = @transform_0, window_bounds = array<i64: 16>}, {transform_indices = @transform_1, window_bounds = array<i64: 1>}, {pipeline_mode = #tpu.pipeline_mode<synchronous>, transform_indices = @transform_2, window_bounds = array<i64: 2, 32>}, {transform_indices = @transform_3, window_bounds = array<i64: 1, 4, 32, 256>}, {transform_indices = @transform_4, window_bounds = array<i64: 4, 1, 256>}, {transform_indices = @transform_5, window_bounds = array<i64: 2, 4, 256>}]} {
    %c0 = arith.constant 0 : index
    %c0_0 = arith.constant 0 : index
    %0 = vector.load %arg3[%c0, %c0_0] : memref<2x32xbf16, #tpu.memory_space<vmem>>, vector<2x32xbf16>
    %c0_1 = arith.constant 0 : index
    %1 = memref.load %arg2[%c0_1] : memref<1xf32, #tpu.memory_space<smem>>
    %c0_2 = arith.constant 0 : index
    %c0_3 = arith.constant 0 : index
    %c0_4 = arith.constant 0 : index
    %c0_5 = arith.constant 0 : index
    %2 = vector.load %arg4[%c0_2, %c0_3, %c0_4, %c0_5] : memref<1x4x32x256xbf16, #tpu.memory_space<vmem>>, vector<1x1x32x256xbf16>
    %3 = vector.shape_cast %2 : vector<1x1x32x256xbf16> to vector<32x256xbf16>
    %cst = arith.constant dense<0.000000e+00> : vector<2x256xf32>
    %4 = tpu.matmul %0, %3, %cst {dimension_numbers = #tpu.dot_dimension_numbers<[1], [0], [0], [1], [0, 0, 1, 1], [], []>} : vector<2x32xbf16>, vector<32x256xbf16>, vector<2x256xf32> -> vector<2x256xf32>
    %c0_6 = arith.constant 0 : index
    %c0_7 = arith.constant 0 : index
    %c0_8 = arith.constant 0 : index
    %5 = vector.load %arg5[%c0_6, %c0_7, %c0_8] : memref<4x1x256xf32, #tpu.memory_space<vmem>>, vector<1x1x256xf32>
    %6 = vector.shape_cast %5 : vector<1x1x256xf32> to vector<1x256xf32>
    %7 = vector.broadcast %6 : vector<1x256xf32> to vector<2x256xf32>
    %8 = arith.addf %4, %7 : vector<2x256xf32>
    %cst_9 = arith.constant 0.000000e+00 : f32
    %9 = vector.broadcast %cst_9 : f32 to vector<2x256xf32>
    %10 = arith.maximumf %8, %9 : vector<2x256xf32>
    %c0_10 = arith.constant 0 : index
    %11 = memref.load %arg1[%c0_10] : memref<16xf32, #tpu.memory_space<smem>>
    %12 = vector.broadcast %11 : f32 to vector<2x256xf32>
    %13 = arith.mulf %12, %10 : vector<2x256xf32>
    %c4 = arith.constant 4 : index
    %14 = memref.load %arg1[%c4] : memref<16xf32, #tpu.memory_space<smem>>
    %15 = vector.broadcast %14 : f32 to vector<2x256xf32>
    %16 = arith.mulf %15, %10 : vector<2x256xf32>
    %c8 = arith.constant 8 : index
    %17 = memref.load %arg1[%c8] : memref<16xf32, #tpu.memory_space<smem>>
    %18 = vector.broadcast %17 : f32 to vector<2x256xf32>
    %19 = arith.mulf %18, %10 : vector<2x256xf32>
    %c12 = arith.constant 12 : index
    %20 = memref.load %arg1[%c12] : memref<16xf32, #tpu.memory_space<smem>>
    %21 = vector.broadcast %20 : f32 to vector<2x256xf32>
    %22 = arith.mulf %21, %10 : vector<2x256xf32>
    %c0_11 = arith.constant 0 : index
    %c1 = arith.constant 1 : index
    %c0_12 = arith.constant 0 : index
    %c0_13 = arith.constant 0 : index
    %23 = vector.load %arg4[%c0_11, %c1, %c0_12, %c0_13] : memref<1x4x32x256xbf16, #tpu.memory_space<vmem>>, vector<1x1x32x256xbf16>
    %24 = vector.shape_cast %23 : vector<1x1x32x256xbf16> to vector<32x256xbf16>
    %cst_14 = arith.constant dense<0.000000e+00> : vector<2x256xf32>
    %25 = tpu.matmul %0, %24, %cst_14 {dimension_numbers = #tpu.dot_dimension_numbers<[1], [0], [0], [1], [0, 0, 1, 1], [], []>} : vector<2x32xbf16>, vector<32x256xbf16>, vector<2x256xf32> -> vector<2x256xf32>
    %c1_15 = arith.constant 1 : index
    %c0_16 = arith.constant 0 : index
    %c0_17 = arith.constant 0 : index
    %26 = vector.load %arg5[%c1_15, %c0_16, %c0_17] : memref<4x1x256xf32, #tpu.memory_space<vmem>>, vector<1x1x256xf32>
    %27 = vector.shape_cast %26 : vector<1x1x256xf32> to vector<1x256xf32>
    %28 = vector.broadcast %27 : vector<1x256xf32> to vector<2x256xf32>
    %29 = arith.addf %25, %28 : vector<2x256xf32>
    %cst_18 = arith.constant 0.000000e+00 : f32
    %30 = vector.broadcast %cst_18 : f32 to vector<2x256xf32>
    %31 = arith.maximumf %29, %30 : vector<2x256xf32>
    %c1_19 = arith.constant 1 : index
    %32 = memref.load %arg1[%c1_19] : memref<16xf32, #tpu.memory_space<smem>>
    %33 = vector.broadcast %32 : f32 to vector<2x256xf32>
    %34 = arith.mulf %33, %31 : vector<2x256xf32>
    %35 = arith.addf %13, %34 : vector<2x256xf32>
    %c5 = arith.constant 5 : index
    %36 = memref.load %arg1[%c5] : memref<16xf32, #tpu.memory_space<smem>>
    %37 = vector.broadcast %36 : f32 to vector<2x256xf32>
    %38 = arith.mulf %37, %31 : vector<2x256xf32>
    %39 = arith.addf %16, %38 : vector<2x256xf32>
    %c9 = arith.constant 9 : index
    %40 = memref.load %arg1[%c9] : memref<16xf32, #tpu.memory_space<smem>>
    %41 = vector.broadcast %40 : f32 to vector<2x256xf32>
    %42 = arith.mulf %41, %31 : vector<2x256xf32>
    %43 = arith.addf %19, %42 : vector<2x256xf32>
    %c13 = arith.constant 13 : index
    %44 = memref.load %arg1[%c13] : memref<16xf32, #tpu.memory_space<smem>>
    %45 = vector.broadcast %44 : f32 to vector<2x256xf32>
    %46 = arith.mulf %45, %31 : vector<2x256xf32>
    %47 = arith.addf %22, %46 : vector<2x256xf32>
    %c0_20 = arith.constant 0 : index
    %c2 = arith.constant 2 : index
    %c0_21 = arith.constant 0 : index
    %c0_22 = arith.constant 0 : index
    %48 = vector.load %arg4[%c0_20, %c2, %c0_21, %c0_22] : memref<1x4x32x256xbf16, #tpu.memory_space<vmem>>, vector<1x1x32x256xbf16>
    %49 = vector.shape_cast %48 : vector<1x1x32x256xbf16> to vector<32x256xbf16>
    %cst_23 = arith.constant dense<0.000000e+00> : vector<2x256xf32>
    %50 = tpu.matmul %0, %49, %cst_23 {dimension_numbers = #tpu.dot_dimension_numbers<[1], [0], [0], [1], [0, 0, 1, 1], [], []>} : vector<2x32xbf16>, vector<32x256xbf16>, vector<2x256xf32> -> vector<2x256xf32>
    %c2_24 = arith.constant 2 : index
    %c0_25 = arith.constant 0 : index
    %c0_26 = arith.constant 0 : index
    %51 = vector.load %arg5[%c2_24, %c0_25, %c0_26] : memref<4x1x256xf32, #tpu.memory_space<vmem>>, vector<1x1x256xf32>
    %52 = vector.shape_cast %51 : vector<1x1x256xf32> to vector<1x256xf32>
    %53 = vector.broadcast %52 : vector<1x256xf32> to vector<2x256xf32>
    %54 = arith.addf %50, %53 : vector<2x256xf32>
    %cst_27 = arith.constant 0.000000e+00 : f32
    %55 = vector.broadcast %cst_27 : f32 to vector<2x256xf32>
    %56 = arith.maximumf %54, %55 : vector<2x256xf32>
    %c2_28 = arith.constant 2 : index
    %57 = memref.load %arg1[%c2_28] : memref<16xf32, #tpu.memory_space<smem>>
    %58 = vector.broadcast %57 : f32 to vector<2x256xf32>
    %59 = arith.mulf %58, %56 : vector<2x256xf32>
    %60 = arith.addf %35, %59 : vector<2x256xf32>
    %c6 = arith.constant 6 : index
    %61 = memref.load %arg1[%c6] : memref<16xf32, #tpu.memory_space<smem>>
    %62 = vector.broadcast %61 : f32 to vector<2x256xf32>
    %63 = arith.mulf %62, %56 : vector<2x256xf32>
    %64 = arith.addf %39, %63 : vector<2x256xf32>
    %c10 = arith.constant 10 : index
    %65 = memref.load %arg1[%c10] : memref<16xf32, #tpu.memory_space<smem>>
    %66 = vector.broadcast %65 : f32 to vector<2x256xf32>
    %67 = arith.mulf %66, %56 : vector<2x256xf32>
    %68 = arith.addf %43, %67 : vector<2x256xf32>
    %c14 = arith.constant 14 : index
    %69 = memref.load %arg1[%c14] : memref<16xf32, #tpu.memory_space<smem>>
    %70 = vector.broadcast %69 : f32 to vector<2x256xf32>
    %71 = arith.mulf %70, %56 : vector<2x256xf32>
    %72 = arith.addf %47, %71 : vector<2x256xf32>
    %c0_29 = arith.constant 0 : index
    %c3 = arith.constant 3 : index
    %c0_30 = arith.constant 0 : index
    %c0_31 = arith.constant 0 : index
    %73 = vector.load %arg4[%c0_29, %c3, %c0_30, %c0_31] : memref<1x4x32x256xbf16, #tpu.memory_space<vmem>>, vector<1x1x32x256xbf16>
    %74 = vector.shape_cast %73 : vector<1x1x32x256xbf16> to vector<32x256xbf16>
    %cst_32 = arith.constant dense<0.000000e+00> : vector<2x256xf32>
    %75 = tpu.matmul %0, %74, %cst_32 {dimension_numbers = #tpu.dot_dimension_numbers<[1], [0], [0], [1], [0, 0, 1, 1], [], []>} : vector<2x32xbf16>, vector<32x256xbf16>, vector<2x256xf32> -> vector<2x256xf32>
    %c3_33 = arith.constant 3 : index
    %c0_34 = arith.constant 0 : index
    %c0_35 = arith.constant 0 : index
    %76 = vector.load %arg5[%c3_33, %c0_34, %c0_35] : memref<4x1x256xf32, #tpu.memory_space<vmem>>, vector<1x1x256xf32>
    %77 = vector.shape_cast %76 : vector<1x1x256xf32> to vector<1x256xf32>
    %78 = vector.broadcast %77 : vector<1x256xf32> to vector<2x256xf32>
    %79 = arith.addf %75, %78 : vector<2x256xf32>
    %cst_36 = arith.constant 0.000000e+00 : f32
    %80 = vector.broadcast %cst_36 : f32 to vector<2x256xf32>
    %81 = arith.maximumf %79, %80 : vector<2x256xf32>
    %c3_37 = arith.constant 3 : index
    %82 = memref.load %arg1[%c3_37] : memref<16xf32, #tpu.memory_space<smem>>
    %83 = vector.broadcast %82 : f32 to vector<2x256xf32>
    %84 = arith.mulf %83, %81 : vector<2x256xf32>
    %85 = arith.addf %60, %84 : vector<2x256xf32>
    %c7 = arith.constant 7 : index
    %86 = memref.load %arg1[%c7] : memref<16xf32, #tpu.memory_space<smem>>
    %87 = vector.broadcast %86 : f32 to vector<2x256xf32>
    %88 = arith.mulf %87, %81 : vector<2x256xf32>
    %89 = arith.addf %64, %88 : vector<2x256xf32>
    %c11 = arith.constant 11 : index
    %90 = memref.load %arg1[%c11] : memref<16xf32, #tpu.memory_space<smem>>
    %91 = vector.broadcast %90 : f32 to vector<2x256xf32>
    %92 = arith.mulf %91, %81 : vector<2x256xf32>
    %93 = arith.addf %68, %92 : vector<2x256xf32>
    %c15 = arith.constant 15 : index
    %94 = memref.load %arg1[%c15] : memref<16xf32, #tpu.memory_space<smem>>
    %95 = vector.broadcast %94 : f32 to vector<2x256xf32>
    %96 = arith.mulf %95, %81 : vector<2x256xf32>
    %97 = arith.addf %72, %96 : vector<2x256xf32>
    %98 = vector.broadcast %1 : f32 to vector<2x256xf32>
    %99 = arith.addf %85, %98 : vector<2x256xf32>
    %100 = arith.negf %99 : vector<2x256xf32>
    %101 = math.exp %100 : vector<2x256xf32>
    %cst_38 = arith.constant 1.000000e+00 : f32
    %102 = vector.broadcast %cst_38 : f32 to vector<2x256xf32>
    %103 = arith.addf %102, %101 : vector<2x256xf32>
    %104 = arith.divf %102, %103 : vector<2x256xf32>
    %c0_39 = arith.constant 0 : index
    %c0_40 = arith.constant 0 : index
    %c0_41 = arith.constant 0 : index
    %105 = vector.load %arg6[%c0_39, %c0_40, %c0_41] : memref<2x4x256xf32, #tpu.memory_space<vmem>>, vector<2x1x256xf32>
    %106 = vector.shape_cast %105 : vector<2x1x256xf32> to vector<2x256xf32>
    %107 = vector.shape_cast %104 : vector<2x256xf32> to vector<2x1x256xf32>
    tpu.vector_store %arg6[%c0_39, %c0_40, %c0_41], %107 {strides = array<i32>} : memref<2x4x256xf32, #tpu.memory_space<vmem>>, vector<2x1x256xf32>,
    %108 = vector.broadcast %1 : f32 to vector<2x256xf32>
    %109 = arith.addf %89, %108 : vector<2x256xf32>
    %110 = arith.negf %109 : vector<2x256xf32>
    %111 = math.exp %110 : vector<2x256xf32>
    %cst_42 = arith.constant 1.000000e+00 : f32
    %112 = vector.broadcast %cst_42 : f32 to vector<2x256xf32>
    %113 = arith.addf %112, %111 : vector<2x256xf32>
    %114 = arith.divf %112, %113 : vector<2x256xf32>
    %c0_43 = arith.constant 0 : index
    %c1_44 = arith.constant 1 : index
    %c0_45 = arith.constant 0 : index
    %115 = vector.load %arg6[%c0_43, %c1_44, %c0_45] : memref<2x4x256xf32, #tpu.memory_space<vmem>>, vector<2x1x256xf32>
    %116 = vector.shape_cast %115 : vector<2x1x256xf32> to vector<2x256xf32>
    %117 = vector.shape_cast %114 : vector<2x256xf32> to vector<2x1x256xf32>
    tpu.vector_store %arg6[%c0_43, %c1_44, %c0_45], %117 {strides = array<i32>} : memref<2x4x256xf32, #tpu.memory_space<vmem>>, vector<2x1x256xf32>,
    %118 = vector.broadcast %1 : f32 to vector<2x256xf32>
    %119 = arith.addf %93, %118 : vector<2x256xf32>
    %120 = arith.negf %119 : vector<2x256xf32>
    %121 = math.exp %120 : vector<2x256xf32>
    %cst_46 = arith.constant 1.000000e+00 : f32
    %122 = vector.broadcast %cst_46 : f32 to vector<2x256xf32>
    %123 = arith.addf %122, %121 : vector<2x256xf32>
    %124 = arith.divf %122, %123 : vector<2x256xf32>
    %c0_47 = arith.constant 0 : index
    %c2_48 = arith.constant 2 : index
    %c0_49 = arith.constant 0 : index
    %125 = vector.load %arg6[%c0_47, %c2_48, %c0_49] : memref<2x4x256xf32, #tpu.memory_space<vmem>>, vector<2x1x256xf32>
    %126 = vector.shape_cast %125 : vector<2x1x256xf32> to vector<2x256xf32>
    %127 = vector.shape_cast %124 : vector<2x256xf32> to vector<2x1x256xf32>
    tpu.vector_store %arg6[%c0_47, %c2_48, %c0_49], %127 {strides = array<i32>} : memref<2x4x256xf32, #tpu.memory_space<vmem>>, vector<2x1x256xf32>,
    %128 = vector.broadcast %1 : f32 to vector<2x256xf32>
    %129 = arith.addf %97, %128 : vector<2x256xf32>
    %130 = arith.negf %129 : vector<2x256xf32>
    %131 = math.exp %130 : vector<2x256xf32>
    %cst_50 = arith.constant 1.000000e+00 : f32
    %132 = vector.broadcast %cst_50 : f32 to vector<2x256xf32>
    %133 = arith.addf %132, %131 : vector<2x256xf32>
    %134 = arith.divf %132, %133 : vector<2x256xf32>
    %c0_51 = arith.constant 0 : index
    %c3_52 = arith.constant 3 : index
    %c0_53 = arith.constant 0 : index
    %135 = vector.load %arg6[%c0_51, %c3_52, %c0_53] : memref<2x4x256xf32, #tpu.memory_space<vmem>>, vector<2x1x256xf32>
    %136 = vector.shape_cast %135 : vector<2x1x256xf32> to vector<2x256xf32>
    %137 = vector.shape_cast %134 : vector<2x256xf32> to vector<2x1x256xf32>
    tpu.vector_store %arg6[%c0_51, %c3_52, %c0_53], %137 {strides = array<i32>} : memref<2x4x256xf32, #tpu.memory_space<vmem>>, vector<2x1x256xf32>,
    return
  }
  func.func @transform_0(%arg0: i32) -> i32 {
    %c0_i32 = arith.constant 0 : i32
    %c0_i32_0 = arith.constant 0 : i32
    return %c0_i32 : i32
  }
  func.func @transform_1(%arg0: i32) -> i32 {
    %c0_i32 = arith.constant 0 : i32
    %c0_i32_0 = arith.constant 0 : i32
    return %c0_i32 : i32
  }
  func.func @transform_2(%arg0: i32) -> (i32, i32) {
    %c0_i32 = arith.constant 0 : i32
    %c0_i32_0 = arith.constant 0 : i32
    %c0_i32_1 = arith.constant 0 : i32
    return %c0_i32, %c0_i32_0 : i32, i32
  }
  func.func @transform_3(%arg0: i32) -> (i32, i32, i32, i32) {
    %c0_i32 = arith.constant 0 : i32
    %c0_i32_0 = arith.constant 0 : i32
    %c0_i32_1 = arith.constant 0 : i32
    %c0_i32_2 = arith.constant 0 : i32
    return %arg0, %c0_i32, %c0_i32_0, %c0_i32_1 : i32, i32, i32, i32
  }
  func.func @transform_4(%arg0: i32) -> (i32, i32, i32) {
    %c0_i32 = arith.constant 0 : i32
    %c0_i32_0 = arith.constant 0 : i32
    %c0_i32_1 = arith.constant 0 : i32
    return %c0_i32, %c0_i32_0, %arg0 : i32, i32, i32
  }
  func.func @transform_5(%arg0: i32) -> (i32, i32, i32) {
    %c0_i32 = arith.constant 0 : i32
    %c0_i32_0 = arith.constant 0 : i32
    %c0_i32_1 = arith.constant 0 : i32
    return %c0_i32, %c0_i32_0, %arg0 : i32, i32, i32
  }
}

</mosaic_0001>

<llo_original>
// kernel: tpu_custom_call.1
$region0: #{tpu_custom_call.1}
  #allocation0 [shape = 'u32[]', space=smem, size = 0x4, offset = 0x4, fixed_abs, tag = 'smem constant byte address 0x4 - core index']
  #allocation1 [shape = 'u32[144,128]{1,0:T(1,128)}', space=vmem, size = 0x12000, scoped, tag = 'internal scratch']
  #allocation2 [shape = 'f32[1]{0:T(128)S(6)}', space=smem, size = 0x200, scoped, tag = 'scoped memory for tpu_custom_call.1']
  %s0 = inlined_call_operand.vmem [shape: f32[16], index: 0, kind: input, shape index: {}]
  %s1 = inlined_call_operand.<no memory space> [shape: f32[1], index: 1, kind: input, shape index: {}]
  %s2 = inlined_call_operand.vmem [shape: bf16[2,32], index: 2, kind: input, shape index: {}]
  %s3 = inlined_call_operand.hbm [shape: bf16[1,4,32,256], index: 3, kind: input, shape index: {}]
  %s4 = inlined_call_operand.hbm [shape: f32[4,1,256], index: 4, kind: input, shape index: {}]
  %s5 = inlined_call_operand.hbm [shape: f32[2,4,256], index: 5, kind: output, shape index: {}]
  %s6 = sld [smem:[#allocation0]]
  $region42: #{tpu_custom_call.1} parent=0
    _
  %s8 = ssub.s32 1, %s6
  %s9 = scalar_select 0, %s8, %s6
  %10 = sst [smem:[#allocation2]] %s1
  $region1: #{tpu_custom_call.1} parent=0
    #allocation3 [shape = 'u8[512]{0}', space=smem, size = 0x200, scoped, tag = 'input window, operand 0, single buffered']
    #allocation4 [shape = 's32[1]{0}', space=sflag, size = 0x4, scoped, tag = 'scoped memory for tpu_custom_call.1']
    #allocation5 [shape = 's32[1]{0}', space=sflag, size = 0x4, scoped, tag = 'scoped memory for tpu_custom_call.1']
    #allocation6 [shape = 's32[1]{0}', space=sflag, size = 0x4, scoped, tag = 'scoped memory for tpu_custom_call.1']
    #allocation7 [shape = 'u8[65536]{0}', space=vmem, size = 0x10000, scoped, tag = 'input window, operand 3, single buffered']
    #allocation8 [shape = 'u8[4096]{0}', space=vmem, size = 0x1000, scoped, tag = 'input window, operand 4, single buffered']
    #allocation9 [shape = 's32[1]{0}', space=sflag, size = 0x4, scoped, tag = 'scoped memory for tpu_custom_call.1']
    #allocation10 [shape = 'u8[8192]{0}', space=vmem, size = 0x2000, scoped, tag = 'output window, operand 0, single buffered']
    %11 = vsyncpa [#allocation6], 0
    %12 = vsyncpa [#allocation4], 0
    %13 = vsyncpa [#allocation9], 0
    %14 = vsyncpa [#allocation5], 0
    // Predicated region
    $region2: #{tpu_custom_call.1} parent=1 // pred_check
      _
    $region3: #{tpu_custom_call.1} parent=1 // pred_check_branch
      %16 = sbr.rel (0) target = $region5
    $region4: #{tpu_custom_call.1} parent=1 // pred_region
      %s18 = ssub.s32 16, 16
      %19 = vsyncadd [#allocation6], %s18
      %s21 = sshll.u32 %s0, 4
      %s22 = int_to_ptr.vmem [resolvable:$true] %s21
      %24 = dma.vmem_to_smem %s22, 16, [#allocation3], [#allocation6]
    $region5: #{tpu_custom_call.1} parent=1 // pred_fallthru
      _
    // Predicated region
    $region6: #{tpu_custom_call.1} parent=1 // pred_check
      _
    $region7: #{tpu_custom_call.1} parent=1 // pred_check_branch
      %26 = sbr.rel (0) target = $region9
    $region8: #{tpu_custom_call.1} parent=1 // pred_region
      _
    $region9: #{tpu_custom_call.1} parent=1 // pred_fallthru
      _
    // Predicated region
    $region10: #{tpu_custom_call.1} parent=1 // pred_check
      _
    $region11: #{tpu_custom_call.1} parent=1 // pred_check_branch
      %28 = sbr.rel (0) target = $region13
    $region12: #{tpu_custom_call.1} parent=1 // pred_region
      _
    $region13: #{tpu_custom_call.1} parent=1 // pred_fallthru
      _
    // Predicated region
    $region14: #{tpu_custom_call.1} parent=1 // pred_check
      _
    $region15: #{tpu_custom_call.1} parent=1 // pred_check_branch
      %30 = sbr.rel (0) target = $region17
    $region16: #{tpu_custom_call.1} parent=1 // pred_region
      %s32 = ssub.s32 2048, 2048
      %33 = vsyncadd [#allocation4], %s32
      %s34 = sshll.u32 [#allocation7], 4
      %s35 = int_to_ptr.vmem [resolvable:$true] %s34
      %40 = dma.hbm_to_vmem [thread:$0]  %s3, 2048, %s35, [#allocation4], 128, 128, 8
    $region17: #{tpu_custom_call.1} parent=1 // pred_fallthru
      _
    // Predicated region
    $region18: #{tpu_custom_call.1} parent=1 // pred_check
      _
    $region19: #{tpu_custom_call.1} parent=1 // pred_check_branch
      %42 = sbr.rel (0) target = $region21
    $region20: #{tpu_custom_call.1} parent=1 // pred_region
      %s44 = ssub.s32 128, 128
      %45 = vsyncadd [#allocation9], %s44
      %s46 = sshll.u32 [#allocation8], 4
      %s47 = int_to_ptr.vmem [resolvable:$true] %s46
      %52 = dma.hbm_to_vmem [thread:$0]  %s4, 128, %s47, [#allocation9], 32, 32, 2
    $region21: #{tpu_custom_call.1} parent=1 // pred_fallthru
      _
    // Predicated region
    $region22: #{tpu_custom_call.1} parent=1 // pred_check
      _
    $region23: #{tpu_custom_call.1} parent=1 // pred_check_branch
      %54 = sbr.rel (0) target = $region25
    $region24: #{tpu_custom_call.1} parent=1 // pred_region
      %55 = dma.done [#allocation6], 16
    $region25: #{tpu_custom_call.1} parent=1 // pred_fallthru
      _
    // Predicated region
    $region26: #{tpu_custom_call.1} parent=1 // pred_check
      _
    $region27: #{tpu_custom_call.1} parent=1 // pred_check_branch
      %57 = sbr.rel (0) target = $region29
    $region28: #{tpu_custom_call.1} parent=1 // pred_region
      %58 = dma.done [#allocation4], 2048
    $region29: #{tpu_custom_call.1} parent=1 // pred_fallthru
      _
    // Predicated region
    $region30: #{tpu_custom_call.1} parent=1 // pred_check
      _
    $region31: #{tpu_custom_call.1} parent=1 // pred_check_branch
      %60 = sbr.rel (0) target = $region33
    $region32: #{tpu_custom_call.1} parent=1 // pred_region
      %61 = dma.done [#allocation9], 128
    $region33: #{tpu_custom_call.1} parent=1 // pred_fallthru
      _
    %62 = sfence
    %v64 = vld [vmem:[%s2] sm:$0x1]
    %s65 = sld [smem:[#allocation2]]
    %v66 = vld [vmem:[#allocation7] sm:$0xff]
    %v67 = vld [vmem:[#allocation7 + $0x8] sm:$0xff]
    %v68 = vld [vmem:[#allocation7 + $0x10] sm:$0xff]
    %v69 = vld [vmem:[#allocation7 + $0x18] sm:$0xff]
    %v70 = vld [vmem:[#allocation8] sm:$0x3]
    %v72 = vlaneseq
    %v73 = vshrl.u32 %v72, 7
    %v74 = vsub.s32 0, %v73
    %v75 = vrot.slane %v70, %v74
    %v76 = vlaneseq
    %v77 = vshrl.u32 %v76, 7
    %v78 = vsub.s32 1, %v77
    %v79 = vrot.slane %v70, %v78
    %v86 = vunpack.c.l.b16 %v66
    %v87 = vunpack.c.h.b16 %v66
    %v88 = vunpack.c.l.b16 %v67
    %v89 = vunpack.c.h.b16 %v67
    %v90 = vunpack.c.l.b16 %v68
    %v91 = vunpack.c.h.b16 %v68
    %v92 = vunpack.c.l.b16 %v69
    %v93 = vunpack.c.h.b16 %v69
    %v94 = vpack.c.b16 %v88, %v86
    %v95 = vpack.c.b16 %v89, %v87
    %v96 = vpack.c.b16 %v92, %v90
    %v97 = vpack.c.b16 %v93, %v91
    %vm102 = vcmask 261120
    %v104 = vsel %vm102, %v64, 0
    %106 = vmatprep.subr.bf16.mxu0 0
    %107 = vmatpush1.bf16.msra.mxu0 0
    %108 = vmatprep.subr.bf16.mxu0 0
    %109 = vmatpush1.bf16.msra.mxu0 0
    %110 = vmatprep.subr.bf16.mxu0 0
    %111 = vmatpush1.bf16.msra.mxu0 0
    %112 = vmatprep.subr.bf16.mxu0 0
    %113 = vmatpush1.bf16.msra.mxu0 0
    %114 = vmatprep.subr.bf16.mxu0 0
    %115 = vmatpush1.bf16.msra.mxu0 0
    %116 = vmatprep.subr.bf16.mxu0 0
    %117 = vmatpush1.bf16.msra.mxu0 0
    %118 = vmatprep.subr.bf16.mxu0 %v97
    %119 = vmatpush1.bf16.msra.mxu0 %v96
    %120 = vmatprep.subr.bf16.mxu0 %v95
    %121 = vmatpush1.bf16.msra.mxu0 %v94
    %122 = vmatprep.subr.bf16.mxu0 0
    %123 = vmatpush2.bf16.msra.mxu0 0
    %124 = vmatprep.subr.bf16.mxu0 0
    %125 = vmatpush2.bf16.msra.mxu0 0
    %126 = vmatprep.subr.bf16.mxu0 0
    %127 = vmatpush2.bf16.msra.mxu0 0
    %128 = vmatprep.subr.bf16.mxu0 0
    %129 = vmatpush2.bf16.msra.mxu0 0
    %130 = vmatprep.subr.bf16.mxu0 0
    %131 = vmatpush2.bf16.msra.mxu0 0
    %132 = vmatprep.subr.bf16.mxu0 0
    %133 = vmatpush2.bf16.msra.mxu0 0
    %134 = vmatprep.subr.bf16.mxu0 0
    %135 = vmatpush2.bf16.msra.mxu0 0
    %136 = vmatprep.subr.bf16.mxu0 0
    %137 = vmatpush2.bf16.msra.mxu0 0
    %138 = vmatprep.mubr.bf16.mxu0 0
    %139 = vmatmul.mubr.bf16.gmra.mxu0 %v104
    %v140 = vpop.f32.mrf.mxu0
    %v141 = vadd.f32 %v75, %v140
    %v142 = vpop.f32.mrf.mxu0
    %v143 = vadd.f32 %v79, %v142
    %v144 = vpop.f32.mrf.mxu0
    %v145 = vpop.f32.mrf.mxu0
    %146 = vdwg.mxu0
    %v147 = vmax.f32 %v141, 0.0
    %v148 = vmax.f32 %v143, 0.0
    %s149 = sld [smem:[#allocation3]]
    %v150 = vstv %s149
    %v151 = vmul.f32 %v150, %v147
    %v152 = vmul.f32 %v150, %v148
    %s153 = sld [smem:[#allocation3 + $0x4]]
    %v154 = vstv %s153
    %v155 = vmul.f32 %v154, %v147
    %v156 = vmul.f32 %v154, %v148
    %s157 = sld [smem:[#allocation3 + $0x8]]
    %v158 = vstv %s157
    %v159 = vmul.f32 %v158, %v147
    %v160 = vmul.f32 %v158, %v148
    %s161 = sld [smem:[#allocation3 + $0xc]]
    %v162 = vstv %s161
    %v163 = vmul.f32 %v162, %v147
    %v164 = vmul.f32 %v162, %v148
    %s165 = scalar_lea.vmem [#allocation7], 32
    %v166 = vld [vmem:[%s165] sm:$0xff]
    %v167 = vld [vmem:[%s165 + $0x8] sm:$0xff]
    %v168 = vld [vmem:[%s165 + $0x10] sm:$0xff]
    %v169 = vld [vmem:[%s165 + $0x18] sm:$0xff]
    %s170 = scalar_lea.vmem [#allocation8], 2
    %v171 = vld [vmem:[%s170] sm:$0x3]
    %v173 = vlaneseq
    %v174 = vshrl.u32 %v173, 7
    %v175 = vsub.s32 0, %v174
    %v176 = vrot.slane %v171, %v175
    %v177 = vlaneseq
    %v178 = vshrl.u32 %v177, 7
    %v179 = vsub.s32 1, %v178
    %v180 = vrot.slane %v171, %v179
    %v187 = vunpack.c.l.b16 %v166
    %v188 = vunpack.c.h.b16 %v166
    %v189 = vunpack.c.l.b16 %v167
    %v190 = vunpack.c.h.b16 %v167
    %v191 = vunpack.c.l.b16 %v168
    %v192 = vunpack.c.h.b16 %v168
    %v193 = vunpack.c.l.b16 %v169
    %v194 = vunpack.c.h.b16 %v169
    %v195 = vpack.c.b16 %v189, %v187
    %v196 = vpack.c.b16 %v190, %v188
    %v197 = vpack.c.b16 %v193, %v191
    %v198 = vpack.c.b16 %v194, %v192
    %203 = vmatprep.subr.bf16.mxu0 0
    %204 = vmatpush1.bf16.msra.mxu0 0
    %205 = vmatprep.subr.bf16.mxu0 0
    %206 = vmatpush1.bf16.msra.mxu0 0
    %207 = vmatprep.subr.bf16.mxu0 0
    %208 = vmatpush1.bf16.msra.mxu0 0
    %209 = vmatprep.subr.bf16.mxu0 0
    %210 = vmatpush1.bf16.msra.mxu0 0
    %211 = vmatprep.subr.bf16.mxu0 0
    %212 = vmatpush1.bf16.msra.mxu0 0
    %213 = vmatprep.subr.bf16.mxu0 0
    %214 = vmatpush1.bf16.msra.mxu0 0
    %215 = vmatprep.subr.bf16.mxu0 %v198
    %216 = vmatpush1.bf16.msra.mxu0 %v197
    %217 = vmatprep.subr.bf16.mxu0 %v196
    %218 = vmatpush1.bf16.msra.mxu0 %v195
    %219 = vmatprep.subr.bf16.mxu0 0
    %220 = vmatpush2.bf16.msra.mxu0 0
    %221 = vmatprep.subr.bf16.mxu0 0
    %222 = vmatpush2.bf16.msra.mxu0 0
    %223 = vmatprep.subr.bf16.mxu0 0
    %224 = vmatpush2.bf16.msra.mxu0 0
    %225 = vmatprep.subr.bf16.mxu0 0
    %226 = vmatpush2.bf16.msra.mxu0 0
    %227 = vmatprep.subr.bf16.mxu0 0
    %228 = vmatpush2.bf16.msra.mxu0 0
    %229 = vmatprep.subr.bf16.mxu0 0
    %230 = vmatpush2.bf16.msra.mxu0 0
    %231 = vmatprep.subr.bf16.mxu0 0
    %232 = vmatpush2.bf16.msra.mxu0 0
    %233 = vmatprep.subr.bf16.mxu0 0
    %234 = vmatpush2.bf16.msra.mxu0 0
    %235 = vmatprep.mubr.bf16.mxu0 0
    %236 = vmatmul.mubr.bf16.gmra.mxu0 %v104
    %v237 = vpop.f32.mrf.mxu0
    %v238 = vadd.f32 %v176, %v237
    %v239 = vpop.f32.mrf.mxu0
    %v240 = vadd.f32 %v180, %v239
    %v241 = vpop.f32.mrf.mxu0
    %v242 = vpop.f32.mrf.mxu0
    %243 = vdwg.mxu0
    %v244 = vmax.f32 %v238, 0.0
    %v245 = vmax.f32 %v240, 0.0
    %s246 = sld [smem:[#allocation3 + $0x1]]
    %v247 = vstv %s246
    %v248 = vmul.f32 %v247, %v244
    %v249 = vmul.f32 %v247, %v245
    %v250 = vadd.f32 %v151, %v248
    %v251 = vadd.f32 %v152, %v249
    %s252 = sld [smem:[#allocation3 + $0x5]]
    %v253 = vstv %s252
    %v254 = vmul.f32 %v253, %v244
    %v255 = vmul.f32 %v253, %v245
    %v256 = vadd.f32 %v155, %v254
    %v257 = vadd.f32 %v156, %v255
    %s258 = sld [smem:[#allocation3 + $0x9]]
    %v259 = vstv %s258
    %v260 = vmul.f32 %v259, %v244
    %v261 = vmul.f32 %v259, %v245
    %v262 = vadd.f32 %v159, %v260
    %v263 = vadd.f32 %v160, %v261
    %s264 = sld [smem:[#allocation3 + $0xd]]
    %v265 = vstv %s264
    %v266 = vmul.f32 %v265, %v244
    %v267 = vmul.f32 %v265, %v245
    %v268 = vadd.f32 %v163, %v266
    %v269 = vadd.f32 %v164, %v267
    %s270 = scalar_lea.vmem [#allocation7], 64
    %v271 = vld [vmem:[%s270] sm:$0xff]
    %v272 = vld [vmem:[%s270 + $0x8] sm:$0xff]
    %v273 = vld [vmem:[%s270 + $0x10] sm:$0xff]
    %v274 = vld [vmem:[%s270 + $0x18] sm:$0xff]
    %s275 = scalar_lea.vmem [#allocation8], 4
    %v276 = vld [vmem:[%s275] sm:$0x3]
    %v278 = vlaneseq
    %v279 = vshrl.u32 %v278, 7
    %v280 = vsub.s32 0, %v279
    %v281 = vrot.slane %v276, %v280
    %v282 = vlaneseq
    %v283 = vshrl.u32 %v282, 7
    %v284 = vsub.s32 1, %v283
    %v285 = vrot.slane %v276, %v284
    %v292 = vunpack.c.l.b16 %v271
    %v293 = vunpack.c.h.b16 %v271
    %v294 = vunpack.c.l.b16 %v272
    %v295 = vunpack.c.h.b16 %v272
    %v296 = vunpack.c.l.b16 %v273
    %v297 = vunpack.c.h.b16 %v273
    %v298 = vunpack.c.l.b16 %v274
    %v299 = vunpack.c.h.b16 %v274
    %v300 = vpack.c.b16 %v294, %v292
    %v301 = vpack.c.b16 %v295, %v293
    %v302 = vpack.c.b16 %v298, %v296
    %v303 = vpack.c.b16 %v299, %v297
    %308 = vmatprep.subr.bf16.mxu0 0
    %309 = vmatpush1.bf16.msra.mxu0 0
    %310 = vmatprep.subr.bf16.mxu0 0
    %311 = vmatpush1.bf16.msra.mxu0 0
    %312 = vmatprep.subr.bf16.mxu0 0
    %313 = vmatpush1.bf16.msra.mxu0 0
    %314 = vmatprep.subr.bf16.mxu0 0
    %315 = vmatpush1.bf16.msra.mxu0 0
    %316 = vmatprep.subr.bf16.mxu0 0
    %317 = vmatpush1.bf16.msra.mxu0 0
    %318 = vmatprep.subr.bf16.mxu0 0
    %319 = vmatpush1.bf16.msra.mxu0 0
    %320 = vmatprep.subr.bf16.mxu0 %v303
    %321 = vmatpush1.bf16.msra.mxu0 %v302
    %322 = vmatprep.subr.bf16.mxu0 %v301
    %323 = vmatpush1.bf16.msra.mxu0 %v300
    %324 = vmatprep.subr.bf16.mxu0 0
    %325 = vmatpush2.bf16.msra.mxu0 0
    %326 = vmatprep.subr.bf16.mxu0 0
    %327 = vmatpush2.bf16.msra.mxu0 0
    %328 = vmatprep.subr.bf16.mxu0 0
    %329 = vmatpush2.bf16.msra.mxu0 0
    %330 = vmatprep.subr.bf16.mxu0 0
    %331 = vmatpush2.bf16.msra.mxu0 0
    %332 = vmatprep.subr.bf16.mxu0 0
    %333 = vmatpush2.bf16.msra.mxu0 0
    %334 = vmatprep.subr.bf16.mxu0 0
    %335 = vmatpush2.bf16.msra.mxu0 0
    %336 = vmatprep.subr.bf16.mxu0 0
    %337 = vmatpush2.bf16.msra.mxu0 0
    %338 = vmatprep.subr.bf16.mxu0 0
    %339 = vmatpush2.bf16.msra.mxu0 0
    %340 = vmatprep.mubr.bf16.mxu0 0
    %341 = vmatmul.mubr.bf16.gmra.mxu0 %v104
    %v342 = vpop.f32.mrf.mxu0
    %v343 = vadd.f32 %v281, %v342
    %v344 = vpop.f32.mrf.mxu0
    %v345 = vadd.f32 %v285, %v344
    %v346 = vpop.f32.mrf.mxu0
    %v347 = vpop.f32.mrf.mxu0
    %348 = vdwg.mxu0
    %v349 = vmax.f32 %v343, 0.0
    %v350 = vmax.f32 %v345, 0.0
    %s351 = sld [smem:[#allocation3 + $0x2]]
    %v352 = vstv %s351
    %v353 = vmul.f32 %v352, %v349
    %v354 = vmul.f32 %v352, %v350
    %v355 = vadd.f32 %v250, %v353
    %v356 = vadd.f32 %v251, %v354
    %s357 = sld [smem:[#allocation3 + $0x6]]
    %v358 = vstv %s357
    %v359 = vmul.f32 %v358, %v349
    %v360 = vmul.f32 %v358, %v350
    %v361 = vadd.f32 %v256, %v359
    %v362 = vadd.f32 %v257, %v360
    %s363 = sld [smem:[#allocation3 + $0xa]]
    %v364 = vstv %s363
    %v365 = vmul.f32 %v364, %v349
    %v366 = vmul.f32 %v364, %v350
    %v367 = vadd.f32 %v262, %v365
    %v368 = vadd.f32 %v263, %v366
    %s369 = sld [smem:[#allocation3 + $0xe]]
    %v370 = vstv %s369
    %v371 = vmul.f32 %v370, %v349
    %v372 = vmul.f32 %v370, %v350
    %v373 = vadd.f32 %v268, %v371
    %v374 = vadd.f32 %v269, %v372
    %s375 = scalar_lea.vmem [#allocation7], 96
    %v376 = vld [vmem:[%s375] sm:$0xff]
    %v377 = vld [vmem:[%s375 + $0x8] sm:$0xff]
    %v378 = vld [vmem:[%s375 + $0x10] sm:$0xff]
    %v379 = vld [vmem:[%s375 + $0x18] sm:$0xff]
    %s380 = scalar_lea.vmem [#allocation8], 6
    %v381 = vld [vmem:[%s380] sm:$0x3]
    %v383 = vlaneseq
    %v384 = vshrl.u32 %v383, 7
    %v385 = vsub.s32 0, %v384
    %v386 = vrot.slane %v381, %v385
    %v387 = vlaneseq
    %v388 = vshrl.u32 %v387, 7
    %v389 = vsub.s32 1, %v388
    %v390 = vrot.slane %v381, %v389
    %v397 = vunpack.c.l.b16 %v376
    %v398 = vunpack.c.h.b16 %v376
    %v399 = vunpack.c.l.b16 %v377
    %v400 = vunpack.c.h.b16 %v377
    %v401 = vunpack.c.l.b16 %v378
    %v402 = vunpack.c.h.b16 %v378
    %v403 = vunpack.c.l.b16 %v379
    %v404 = vunpack.c.h.b16 %v379
    %v405 = vpack.c.b16 %v399, %v397
    %v406 = vpack.c.b16 %v400, %v398
    %v407 = vpack.c.b16 %v403, %v401
    %v408 = vpack.c.b16 %v404, %v402
    %413 = vmatprep.subr.bf16.mxu0 0
    %414 = vmatpush1.bf16.msra.mxu0 0
    %415 = vmatprep.subr.bf16.mxu0 0
    %416 = vmatpush1.bf16.msra.mxu0 0
    %417 = vmatprep.subr.bf16.mxu0 0
    %418 = vmatpush1.bf16.msra.mxu0 0
    %419 = vmatprep.subr.bf16.mxu0 0
    %420 = vmatpush1.bf16.msra.mxu0 0
    %421 = vmatprep.subr.bf16.mxu0 0
    %422 = vmatpush1.bf16.msra.mxu0 0
    %423 = vmatprep.subr.bf16.mxu0 0
    %424 = vmatpush1.bf16.msra.mxu0 0
    %425 = vmatprep.subr.bf16.mxu0 %v408
    %426 = vmatpush1.bf16.msra.mxu0 %v407
    %427 = vmatprep.subr.bf16.mxu0 %v406
    %428 = vmatpush1.bf16.msra.mxu0 %v405
    %429 = vmatprep.subr.bf16.mxu0 0
    %430 = vmatpush2.bf16.msra.mxu0 0
    %431 = vmatprep.subr.bf16.mxu0 0
    %432 = vmatpush2.bf16.msra.mxu0 0
    %433 = vmatprep.subr.bf16.mxu0 0
    %434 = vmatpush2.bf16.msra.mxu0 0
    %435 = vmatprep.subr.bf16.mxu0 0
    %436 = vmatpush2.bf16.msra.mxu0 0
    %437 = vmatprep.subr.bf16.mxu0 0
    %438 = vmatpush2.bf16.msra.mxu0 0
    %439 = vmatprep.subr.bf16.mxu0 0
    %440 = vmatpush2.bf16.msra.mxu0 0
    %441 = vmatprep.subr.bf16.mxu0 0
    %442 = vmatpush2.bf16.msra.mxu0 0
    %443 = vmatprep.subr.bf16.mxu0 0
    %444 = vmatpush2.bf16.msra.mxu0 0
    %445 = vmatprep.mubr.bf16.mxu0 0
    %446 = vmatmul.mubr.bf16.gmra.mxu0 %v104
    %v447 = vpop.f32.mrf.mxu0
    %v448 = vadd.f32 %v386, %v447
    %v449 = vpop.f32.mrf.mxu0
    %v450 = vadd.f32 %v390, %v449
    %v451 = vpop.f32.mrf.mxu0
    %v452 = vpop.f32.mrf.mxu0
    %453 = vdwg.mxu0
    %v454 = vmax.f32 %v448, 0.0
    %v455 = vmax.f32 %v450, 0.0
    %s456 = sld [smem:[#allocation3 + $0x3]]
    %v457 = vstv %s456
    %v458 = vmul.f32 %v457, %v454
    %v459 = vmul.f32 %v457, %v455
    %v460 = vadd.f32 %v355, %v458
    %v461 = vadd.f32 %v356, %v459
    %s462 = sld [smem:[#allocation3 + $0x7]]
    %v463 = vstv %s462
    %v464 = vmul.f32 %v463, %v454
    %v465 = vmul.f32 %v463, %v455
    %v466 = vadd.f32 %v361, %v464
    %v467 = vadd.f32 %v362, %v465
    %s468 = sld [smem:[#allocation3 + $0xb]]
    %v469 = vstv %s468
    %v470 = vmul.f32 %v469, %v454
    %v471 = vmul.f32 %v469, %v455
    %v472 = vadd.f32 %v367, %v470
    %v473 = vadd.f32 %v368, %v471
    %s474 = sld [smem:[#allocation3 + $0xf]]
    %v475 = vstv %s474
    %v476 = vmul.f32 %v475, %v454
    %v477 = vmul.f32 %v475, %v455
    %v478 = vadd.f32 %v373, %v476
    %v479 = vadd.f32 %v374, %v477
    %v480 = vstv %s65
    %v481 = vadd.f32 %v460, %v480
    %v482 = vadd.f32 %v461, %v480
    %v483 = vxor.u32 %v481, 2147483648
    %v484 = vxor.u32 %v482, 2147483648
    %v485 = vmul.f32 %v483, 1.442695
    %v486 = vpow.pop %v485
    %v487 = vmul.f32 %v484, 1.442695
    %v488 = vpow.pop %v487
    %v489 = vadd.f32 %v486, 1.0
    %v490 = vadd.f32 %v488, 1.0
    %v491 = vrcp.pop %v489
    %v492 = vmul.f32 1.0, %v491
    %v493 = vrcp.pop %v490
    %v494 = vmul.f32 1.0, %v493
    %v497 = vcombine.low %v492, %v494
    %v499 = vunpack.c.l.s4 1966171168
    %v500 = vunpack.c.0.s8 %v499
    %v501 = vlaneseq
    %v502 = vshrl.u32 %v501, 7
    %v503 = vsub.s32 %v500, %v502
    %v504 = vrot.slane %v497, %v503
    %v505 = vcombine.high %v504, %v504
    %v507 = vunpack.c.l.s4 1966171168
    %v508 = vunpack.c.0.s8 %v507
    %v509 = vlaneseq
    %v510 = vshrl.u32 %v509, 7
    %v511 = vsub.s32 %v508, %v510
    %v512 = vrot.slane %v504, %v511
    %v514 = vunpack.c.l.s4 1966171168
    %v515 = vunpack.c.0.s8 %v514
    %v516 = vlaneseq
    %v517 = vshrl.u32 %v516, 7
    %v518 = vsub.s32 %v515, %v517
    %v519 = vrot.slane %v505, %v518
    %v522 = vlaneseq
    %vm523 = vcmp.ge.s32.totalorder %v522, 0
    %vm524 = vcmp.lt.s32.totalorder %v522, 256
    %vm525 = vmand %vm523, %vm524
    %526 = vst.msk [vmem:[#allocation10] ss:$4 sm:$0x3] %vm525, %v512
    %s527 = scalar_lea.vmem [#allocation10], 8
    %528 = vst.msk [vmem:[%s527] ss:$4 sm:$0x3] %vm525, %v519
    %v529 = vadd.f32 %v466, %v480
    %v530 = vadd.f32 %v467, %v480
    %v531 = vxor.u32 %v529, 2147483648
    %v532 = vxor.u32 %v530, 2147483648
    %v533 = vmul.f32 %v531, 1.442695
    %v534 = vpow.pop %v533
    %v535 = vmul.f32 %v532, 1.442695
    %v536 = vpow.pop %v535
    %v537 = vadd.f32 %v534, 1.0
    %v538 = vadd.f32 %v536, 1.0
    %v539 = vrcp.pop %v537
    %v540 = vmul.f32 1.0, %v539
    %v541 = vrcp.pop %v538
    %v542 = vmul.f32 1.0, %v541
    %v545 = vcombine.low %v540, %v542
    %v547 = vunpack.c.l.s4 1966171168
    %v548 = vunpack.c.0.s8 %v547
    %v549 = vlaneseq
    %v550 = vshrl.u32 %v549, 7
    %v551 = vsub.s32 %v548, %v550
    %v552 = vrot.slane %v545, %v551
    %v553 = vcombine.high %v552, %v552
    %v555 = vunpack.c.l.s4 1966171168
    %v556 = vunpack.c.0.s8 %v555
    %v557 = vlaneseq
    %v558 = vshrl.u32 %v557, 7
    %v559 = vsub.s32 %v556, %v558
    %v560 = vrot.slane %v552, %v559
    %v562 = vunpack.c.l.s4 1966171168
    %v563 = vunpack.c.0.s8 %v562
    %v564 = vlaneseq
    %v565 = vshrl.u32 %v564, 7
    %v566 = vsub.s32 %v563, %v565
    %v567 = vrot.slane %v553, %v566
    %s570 = scalar_lea.vmem [#allocation10], 1
    %571 = vst.msk [vmem:[%s570] ss:$4 sm:$0x3] %vm525, %v560
    %s572 = scalar_lea.vmem [#allocation10], 9
    %573 = vst.msk [vmem:[%s572] ss:$4 sm:$0x3] %vm525, %v567
    %v574 = vadd.f32 %v472, %v480
    %v575 = vadd.f32 %v473, %v480
    %v576 = vxor.u32 %v574, 2147483648
    %v577 = vxor.u32 %v575, 2147483648
    %v578 = vmul.f32 %v576, 1.442695
    %v579 = vpow.pop %v578
    %v580 = vmul.f32 %v577, 1.442695
    %v581 = vpow.pop %v580
    %v582 = vadd.f32 %v579, 1.0
    %v583 = vadd.f32 %v581, 1.0
    %v584 = vrcp.pop %v582
    %v585 = vmul.f32 1.0, %v584
    %v586 = vrcp.pop %v583
    %v587 = vmul.f32 1.0, %v586
    %v590 = vcombine.low %v585, %v587
    %v592 = vunpack.c.l.s4 1966171168
    %v593 = vunpack.c.0.s8 %v592
    %v594 = vlaneseq
    %v595 = vshrl.u32 %v594, 7
    %v596 = vsub.s32 %v593, %v595
    %v597 = vrot.slane %v590, %v596
    %v598 = vcombine.high %v597, %v597
    %v600 = vunpack.c.l.s4 1966171168
    %v601 = vunpack.c.0.s8 %v600
    %v602 = vlaneseq
    %v603 = vshrl.u32 %v602, 7
    %v604 = vsub.s32 %v601, %v603
    %v605 = vrot.slane %v597, %v604
    %v607 = vunpack.c.l.s4 1966171168
    %v608 = vunpack.c.0.s8 %v607
    %v609 = vlaneseq
    %v610 = vshrl.u32 %v609, 7
    %v611 = vsub.s32 %v608, %v610
    %v612 = vrot.slane %v598, %v611
    %s615 = scalar_lea.vmem [#allocation10], 2
    %616 = vst.msk [vmem:[%s615] ss:$4 sm:$0x3] %vm525, %v605
    %s617 = scalar_lea.vmem [#allocation10], 10
    %618 = vst.msk [vmem:[%s617] ss:$4 sm:$0x3] %vm525, %v612
    %v619 = vadd.f32 %v478, %v480
    %v620 = vadd.f32 %v479, %v480
    %v621 = vxor.u32 %v619, 2147483648
    %v622 = vxor.u32 %v620, 2147483648
    %v623 = vmul.f32 %v621, 1.442695
    %v624 = vpow.pop %v623
    %v625 = vmul.f32 %v622, 1.442695
    %v626 = vpow.pop %v625
    %v627 = vadd.f32 %v624, 1.0
    %v628 = vadd.f32 %v626, 1.0
    %v629 = vrcp.pop %v627
    %v630 = vmul.f32 1.0, %v629
    %v631 = vrcp.pop %v628
    %v632 = vmul.f32 1.0, %v631
    %v635 = vcombine.low %v630, %v632
    %v637 = vunpack.c.l.s4 1966171168
    %v638 = vunpack.c.0.s8 %v637
    %v639 = vlaneseq
    %v640 = vshrl.u32 %v639, 7
    %v641 = vsub.s32 %v638, %v640
    %v642 = vrot.slane %v635, %v641
    %v643 = vcombine.high %v642, %v642
    %v645 = vunpack.c.l.s4 1966171168
    %v646 = vunpack.c.0.s8 %v645
    %v647 = vlaneseq
    %v648 = vshrl.u32 %v647, 7
    %v649 = vsub.s32 %v646, %v648
    %v650 = vrot.slane %v642, %v649
    %v652 = vunpack.c.l.s4 1966171168
    %v653 = vunpack.c.0.s8 %v652
    %v654 = vlaneseq
    %v655 = vshrl.u32 %v654, 7
    %v656 = vsub.s32 %v653, %v655
    %v657 = vrot.slane %v643, %v656
    %s660 = scalar_lea.vmem [#allocation10], 3
    %661 = vst.msk [vmem:[%s660] ss:$4 sm:$0x3] %vm525, %v650
    %s662 = scalar_lea.vmem [#allocation10], 11
    %663 = vst.msk [vmem:[%s662] ss:$4 sm:$0x3] %vm525, %v657
    // Predicated region
    $region34: #{tpu_custom_call.1} parent=1 // pred_check
      _
    $region35: #{tpu_custom_call.1} parent=1 // pred_check_branch
      %665 = sbr.rel (0) target = $region37
    $region36: #{tpu_custom_call.1} parent=1 // pred_region
      %s667 = ssub.s32 256, 256
      %668 = vsyncadd [#allocation5], %s667
      %s669 = sshll.u32 [#allocation10], 4
      %s670 = int_to_ptr.vmem [resolvable:$true] %s669
      %675 = dma.vmem_to_hbm [thread:$0]  %s670, 256, %s5, [#allocation5], 128, 128, 8
    $region37: #{tpu_custom_call.1} parent=1 // pred_fallthru
      _
    // Predicated region
    $region38: #{tpu_custom_call.1} parent=1 // pred_check
      _
    $region39: #{tpu_custom_call.1} parent=1 // pred_check_branch
      %677 = sbr.rel (0) target = $region41
    $region40: #{tpu_custom_call.1} parent=1 // pred_region
      %678 = dma.done [#allocation5], 256
    $region41: #{tpu_custom_call.1} parent=1 // pred_fallthru
      _
    %679 = vsyncpa [#allocation4], 1
    %680 = vsyncpa [#allocation9], 1
    %681 = vsyncpa [#allocation5], 1
    %682 = vsyncpa [#allocation6], 1

</llo_original>
